<compile_context>
chip_gen: v7x
topology: tpu7x:2x2x1
jax: 0.10.0
libtpu: 0.0.40
codegen_flags: <defaults>
</compile_context>

<pallas_src>
import functools
import math

import jax
import jax.numpy as jnp
from jax.experimental import pallas as pl
from jax.experimental.pallas import tpu as pltpu


def _sublane(dtype):
    return 16 if jnp.dtype(dtype).itemsize <= 2 else 8


def _round_up(x, m):
    return -(-x // m) * m


def _round_down(x, m):
    return (x // m) * m


def _vmem_capacity_bytes():
    """Physical VMEM per TensorCore; conservative fallback = v7x (64 MiB)."""
    try:
        cap = getattr(pltpu.get_tpu_info(), "vmem_capacity_bytes", None)
        if cap:
            return int(cap)
    except Exception:
        pass
    return 64 * 1024 * 1024


# ---------------------------------------------------------------------------
# Kernels
# ---------------------------------------------------------------------------


def _ohem_rowwise_kernel(x_ref, o_ref, *, coef, weight):
    """Single pass: full rows resident -> per-row min/max + normalize."""
    x = x_ref[...]
    mn = jnp.min(x, axis=-1, keepdims=True).astype(jnp.float32)
    mx = jnp.max(x, axis=-1, keepdims=True).astype(jnp.float32)
    # out = coef*(x-mn)/(mx-mn) + weight  ==  x*scale + offset
    # NOTE: mx == mn reproduces the reference's divide-by-zero (inf/nan).
    scale = coef * pl.reciprocal(mx - mn)
    offset = weight - mn * scale
    if x.dtype == jnp.float32:
        y = x * scale + offset
    else:
        # Keep the big (bb, N) elementwise math in the native dtype
        # (bf16 VALU on v6e/v7x); scale/offset were computed in f32.
        y = x * scale.astype(x.dtype) + offset.astype(x.dtype)
    o_ref[...] = y.astype(o_ref.dtype)


def _ohem_reduce_kernel(x_ref, scale_ref, offset_ref, *, coef, weight, n_total,
                        tn, mask_cols):
    """Pass 1 (column-tiled path): running per-row min/max -> scale/offset."""
    j = pl.program_id(1)
    x = x_ref[...].astype(jnp.float32)
    if mask_cols:
        col = jax.lax.broadcasted_iota(jnp.int32, x.shape, 1) + j * tn
        valid = col < n_total
        x_for_min = jnp.where(valid, x, jnp.inf)
        x_for_max = jnp.where(valid, x, -jnp.inf)
    else:
        x_for_min = x_for_max = x
    blk_mn = jnp.min(x_for_min, axis=-1, keepdims=True)
    blk_mx = jnp.max(x_for_max, axis=-1, keepdims=True)

    @pl.when(j == 0)
    def _():
        scale_ref[...] = jnp.full_like(scale_ref, jnp.inf)      # running min
        offset_ref[...] = jnp.full_like(offset_ref, -jnp.inf)   # running max

    scale_ref[...] = jnp.minimum(scale_ref[...], blk_mn)
    offset_ref[...] = jnp.maximum(offset_ref[...], blk_mx)

    @pl.when(j == pl.num_programs(1) - 1)
    def _():
        mn = scale_ref[...]
        mx = offset_ref[...]
        s = coef * pl.reciprocal(mx - mn)
        scale_ref[...] = s
        offset_ref[...] = weight - mn * s


def _ohem_normalize_kernel(x_ref, scale_ref, offset_ref, o_ref):
    """Pass 2 (column-tiled path): out = x*scale + offset."""
    x = x_ref[...]
    s = scale_ref[...]
    off = offset_ref[...]
    if x.dtype == jnp.float32:
        y = x * s + off
    else:
        y = x * s.astype(x.dtype) + off.astype(x.dtype)
    o_ref[...] = y.astype(o_ref.dtype)


# ---------------------------------------------------------------------------
# Wrapper
# ---------------------------------------------------------------------------


def p_ohem3_forward(difference, *, weight, coef=10.0):
    """Pallas equivalent of P_OHEM3.forward. Input: [B, C, H, W] or [B, C, L]."""
    # The PyTorch module detaches `difference` before weighting.
    difference = jax.lax.stop_gradient(difference)
    orig_shape = difference.shape
    b = orig_shape[0]
    n = math.prod(orig_shape[1:])
    x = difference.reshape(b, n)
    dtype = x.dtype
    itemsize = jnp.dtype(dtype).itemsize
    sub = _sublane(dtype)
    row_bytes = n * itemsize

    coef = float(coef)
    weight = float(weight)
    # TODO(synk): only scalar `weight` is supported; a per-pixel weight tensor
    # would have to be streamed as an extra kernel input.

    # --- generation-aware VMEM budgets ------------------------------------
    vmem_cap = _vmem_capacity_bytes()          # 64 MiB (v7x) / 128 MiB (v5e/v6e)
    vmem_limit = (vmem_cap * 3) // 4           # leave headroom for compiler scratch
    block_budget = vmem_limit // 2             # total bytes for pipelined blocks
    # Target ~4 MiB input blocks (measured ~85% of HBM roofline).
    target_block_bytes = max(sub * 128 * itemsize,
                             min(4 * 1024 * 1024, block_budget // 4))

    # Per row-block: double-buffered input + double-buffered output = 4x bytes.
    min_rows = min(b, sub)
    single_pass = (4 * min_rows * row_bytes) <= block_budget

    if single_pass:
        if b <= sub:
            bb = b                                            # one (small) block
        else:
            bb = max(sub, _round_down(target_block_bytes // row_bytes, sub))
            # VMEM cap (in + out, double-buffered).
            bb = min(bb, max(sub, _round_down(block_budget // (4 * row_bytes), sub)))
            # Keep >= 2 grid steps so v7x can shard rows across both TCs.
            bb = min(bb, max(sub, _round_up(_round_up(b, 2) // 2, sub)))
        grid = (pl.cdiv(b, bb),)
        # NOTE: best perf when N % 128 == 0 (unmasked lane-dense stores); the
        # demo shape (4*16*16 = 1024) satisfies this.
        kernel = functools.partial(_ohem_rowwise_kernel, coef=coef, weight=weight)
        out = pl.pallas_call(
            kernel,
            out_shape=jax.ShapeDtypeStruct((b, n), dtype),
            grid=grid,
            in_specs=[pl.BlockSpec((bb, n), lambda i: (i, 0))],
            out_specs=pl.BlockSpec((bb, n), lambda i: (i, 0)),
            compiler_params=pltpu.CompilerParams(
                dimension_semantics=("parallel",),
                vmem_limit_bytes=vmem_limit,
            ),
            cost_estimate=pl.CostEstimate(
                flops=4 * b * n,
                transcendentals=b,
                bytes_accessed=2 * b * n * itemsize,
            ),
        )(x)
        return out.reshape(orig_shape)

    # --- huge-row path: two-pass, column-tiled -----------------------------
    bb = min(b, sub)                           # full sublane tile, never below it
    tn = max(128, _round_down(target_block_bytes // (bb * itemsize), 128))
    tn = min(tn, _round_up(n, 128))
    row_grid = pl.cdiv(b, bb)
    col_grid = pl.cdiv(n, tn)
    mask_cols = (n % tn) != 0

    reduce_kernel = functools.partial(
        _ohem_reduce_kernel, coef=coef, weight=weight, n_total=n, tn=tn,
        mask_cols=mask_cols)
    scale, offset = pl.pallas_call(
        reduce_kernel,
        out_shape=(jax.ShapeDtypeStruct((b, 1), jnp.float32),
                   jax.ShapeDtypeStruct((b, 1), jnp.float32)),
        grid=(row_grid, col_grid),
        in_specs=[pl.BlockSpec((bb, tn), lambda i, j: (i, j))],
        out_specs=(pl.BlockSpec((bb, 1), lambda i, j: (i, 0)),
                   pl.BlockSpec((bb, 1), lambda i, j: (i, 0))),
        compiler_params=pltpu.CompilerParams(
            dimension_semantics=("parallel", "arbitrary"),
            vmem_limit_bytes=vmem_limit,
        ),
        cost_estimate=pl.CostEstimate(
            flops=2 * b * n, transcendentals=b,
            bytes_accessed=b * n * itemsize),
    )(x)

    out = pl.pallas_call(
        _ohem_normalize_kernel,
        out_shape=jax.ShapeDtypeStruct((b, n), dtype),
        grid=(row_grid, col_grid),
        in_specs=[pl.BlockSpec((bb, tn), lambda i, j: (i, j)),
                  pl.BlockSpec((bb, 1), lambda i, j: (i, 0)),
                  pl.BlockSpec((bb, 1), lambda i, j: (i, 0))],
        out_specs=pl.BlockSpec((bb, tn), lambda i, j: (i, j)),
        compiler_params=pltpu.CompilerParams(
            dimension_semantics=("parallel", "parallel"),
            vmem_limit_bytes=vmem_limit,
        ),
        cost_estimate=pl.CostEstimate(
            flops=2 * b * n, transcendentals=0,
            bytes_accessed=2 * b * n * itemsize),
    )(x, scale, offset)
    return out.reshape(orig_shape)


def p_ohem3_reference(difference, *, weight, coef=10.0):
    """Pure-JAX reference mirroring the PyTorch module."""
    b = difference.shape[0]
    flat = difference.reshape(b, -1)
    mn = jnp.min(flat, axis=1).reshape((b,) + (1,) * (difference.ndim - 1))
    mx = jnp.max(flat, axis=1).reshape((b,) + (1,) * (difference.ndim - 1))
    return coef * (difference - mn) / (mx - mn) + weight


if __name__ == "__main__":
    key = jax.random.PRNGKey(0)
    # Small shape consistent with a 4-D "difference" field: [B, C, H, W]
    B, C, H, W = 2, 4, 16, 16
    difference = jax.random.normal(key, (B, C, H, W), dtype=jnp.float32)

    # Deterministic module parameters (P_OHEM3(weight, coef=10)).
    weight = 1.0   # scalar base weight
    coef = 10.0

    out = p_ohem3_forward(difference, weight=weight, coef=coef)
    out = jax.block_until_ready(out)

    ref = p_ohem3_reference(difference, weight=weight, coef=coef)
    assert out.shape == difference.shape
    assert jnp.allclose(out, ref, rtol=1e-5, atol=1e-5), "mismatch vs reference"

    print("KERNEL_OK")
</pallas_src>

<mosaic_0001>
module attributes {stable_mosaic.version = 11 : i64} {
  func.func @_ohem_rowwise_kernel(%arg0: i32, %arg1: memref<2x1024xf32, #tpu.memory_space<vmem>>, %arg2: memref<2x1024xf32, #tpu.memory_space<vmem>>) attributes {dimension_semantics = [#tpu.dimension_semantics<parallel>], iteration_bounds = array<i64: 1>, scalar_prefetch = 0 : i64, scratch_operands = 0 : i64, tpu.core_type = #tpu.core_type<tc>, window_params = [{transform_indices = @transform_0, window_bounds = array<i64: 2, 1024>}, {transform_indices = @transform_1, window_bounds = array<i64: 2, 1024>}]} {
    %c0 = arith.constant 0 : index
    %c0_0 = arith.constant 0 : index
    %0 = vector.load %arg1[%c0, %c0_0] : memref<2x1024xf32, #tpu.memory_space<vmem>>, vector<2x1024xf32>
    %cst = arith.constant dense<0x7F800000> : vector<2xf32>
    %1 = vector.multi_reduction <minimumf>, %0, %cst [1] : vector<2x1024xf32> to vector<2xf32>
    %2 = vector.shape_cast %1 : vector<2xf32> to vector<2x1xf32>
    %cst_1 = arith.constant dense<0xFF800000> : vector<2xf32>
    %3 = vector.multi_reduction <maximumf>, %0, %cst_1 [1] : vector<2x1024xf32> to vector<2xf32>
    %4 = vector.shape_cast %3 : vector<2xf32> to vector<2x1xf32>
    %5 = arith.subf %4, %2 : vector<2x1xf32>
    %6 = tpu.reciprocal %5 : vector<2x1xf32> -> vector<2x1xf32>
    %cst_2 = arith.constant 1.000000e+01 : f32
    %7 = vector.broadcast %cst_2 : f32 to vector<2x1xf32>
    %8 = arith.mulf %7, %6 : vector<2x1xf32>
    %9 = arith.mulf %2, %8 : vector<2x1xf32>
    %cst_3 = arith.constant 1.000000e+00 : f32
    %10 = vector.broadcast %cst_3 : f32 to vector<2x1xf32>
    %11 = arith.subf %10, %9 : vector<2x1xf32>
    %12 = vector.broadcast %8 : vector<2x1xf32> to vector<2x1024xf32>
    %13 = arith.mulf %0, %12 : vector<2x1024xf32>
    %14 = vector.broadcast %11 : vector<2x1xf32> to vector<2x1024xf32>
    %15 = arith.addf %13, %14 : vector<2x1024xf32>
    %c0_4 = arith.constant 0 : index
    %c0_5 = arith.constant 0 : index
    %16 = vector.load %arg2[%c0_4, %c0_5] : memref<2x1024xf32, #tpu.memory_space<vmem>>, vector<2x1024xf32>
    tpu.vector_store %arg2[%c0_4, %c0_5], %15 {strides = array<i32>} : memref<2x1024xf32, #tpu.memory_space<vmem>>, vector<2x1024xf32>,
    return
  }
  func.func @transform_0(%arg0: i32) -> (i32, i32) {
    %c0_i32 = arith.constant 0 : i32
    %c0_i32_0 = arith.constant 0 : i32
    return %arg0, %c0_i32 : i32, i32
  }
  func.func @transform_1(%arg0: i32) -> (i32, i32) {
    %c0_i32 = arith.constant 0 : i32
    %c0_i32_0 = arith.constant 0 : i32
    return %arg0, %c0_i32 : i32, i32
  }
}

</mosaic_0001>

<llo_original>
// kernel: tpu_custom_call.1
$region0: #{tpu_custom_call.1}
  #allocation0 [shape = 'u32[]', space=smem, size = 0x4, offset = 0x4, fixed_abs, tag = 'smem constant byte address 0x4 - core index']
  #allocation1 [shape = 'u32[144,128]{1,0:T(1,128)}', space=vmem, size = 0x12000, scoped, tag = 'internal scratch']
  %s0 = inlined_call_operand.hbm [shape: f32[2,1024], index: 0, kind: input, shape index: {}]
  %s1 = inlined_call_operand.hbm [shape: f32[2,1024], index: 1, kind: output, shape index: {}]
  %s2 = sld [smem:[#allocation0]]
  $region18: #{tpu_custom_call.1} parent=0
    _
  %s4 = ssub.s32 1, %s2
  %s5 = scalar_select 0, %s4, %s2
  $region1: #{tpu_custom_call.1} parent=0
    #allocation2 [shape = 'u8[8192]{0}', space=vmem, size = 0x2000, scoped, tag = 'input window, operand 0, single buffered']
    #allocation3 [shape = 's32[1]{0}', space=sflag, size = 0x4, scoped, tag = 'scoped memory for tpu_custom_call.1']
    #allocation4 [shape = 's32[1]{0}', space=sflag, size = 0x4, scoped, tag = 'scoped memory for tpu_custom_call.1']
    #allocation5 [shape = 'u8[8192]{0}', space=vmem, size = 0x2000, scoped, tag = 'output window, operand 0, single buffered']
    %6 = vsyncpa [#allocation3], 0
    %7 = vsyncpa [#allocation4], 0
    // Predicated region
    $region2: #{tpu_custom_call.1} parent=1 // pred_check
      _
    $region3: #{tpu_custom_call.1} parent=1 // pred_check_branch
      %9 = sbr.rel (0) target = $region5
    $region4: #{tpu_custom_call.1} parent=1 // pred_region
      %s11 = ssub.s32 256, 256
      %12 = vsyncadd [#allocation3], %s11
      %s14 = sshll.u32 [#allocation2], 4
      %s15 = int_to_ptr.vmem [resolvable:$true] %s14
      %17 = dma.hbm_to_vmem [thread:$0]  %s0, 256, %s15, [#allocation3]
    $region5: #{tpu_custom_call.1} parent=1 // pred_fallthru
      _
    // Predicated region
    $region6: #{tpu_custom_call.1} parent=1 // pred_check
      _
    $region7: #{tpu_custom_call.1} parent=1 // pred_check_branch
      %19 = sbr.rel (0) target = $region9
    $region8: #{tpu_custom_call.1} parent=1 // pred_region
      %20 = dma.done [#allocation3], 256
    $region9: #{tpu_custom_call.1} parent=1 // pred_fallthru
      _
    %v21 = vld [vmem:[#allocation2] sm:$0xff]
    %v22 = vld [vmem:[#allocation2 + $0x8] sm:$0xff]
    %v25 = vcombine.high %v21, %v21
    %v27 = vunpack.c.l.s4 1983009808
    %v28 = vunpack.c.0.s8 %v27
    %v29 = vlaneseq
    %v30 = vshrl.u32 %v29, 7
    %v31 = vsub.s32 %v28, %v30
    %v32 = vrot.slane %v21, %v31
    %v34 = vunpack.c.l.s4 1983009808
    %v35 = vunpack.c.0.s8 %v34
    %v36 = vlaneseq
    %v37 = vshrl.u32 %v36, 7
    %v38 = vsub.s32 %v35, %v37
    %v39 = vrot.slane %v25, %v38
    %v40 = vcombine.high %v32, %v32
    %v41 = vcombine.high %v39, %v39
    %v42 = vcombine.high %v22, %v22
    %v44 = vunpack.c.l.s4 1983009808
    %v45 = vunpack.c.0.s8 %v44
    %v46 = vlaneseq
    %v47 = vshrl.u32 %v46, 7
    %v48 = vsub.s32 %v45, %v47
    %v49 = vrot.slane %v22, %v48
    %v51 = vunpack.c.l.s4 1983009808
    %v52 = vunpack.c.0.s8 %v51
    %v53 = vlaneseq
    %v54 = vshrl.u32 %v53, 7
    %v55 = vsub.s32 %v52, %v54
    %v56 = vrot.slane %v42, %v55
    %v57 = vcombine.high %v49, %v49
    %v58 = vcombine.high %v56, %v56
    %vm67 = vcmask 1041408
    %v68 = vsel %vm67, %v32, inf
    %v69 = vsel %vm67, %v40, inf
    %v70 = vsel %vm67, %v39, inf
    %v71 = vsel %vm67, %v41, inf
    %v72 = vsel %vm67, %v49, inf
    %v73 = vmin.f32 %v68, %v72
    %v74 = vsel %vm67, %v57, inf
    %v75 = vmin.f32 %v69, %v74
    %v76 = vsel %vm67, %v56, inf
    %v77 = vmin.f32 %v70, %v76
    %v78 = vsel %vm67, %v58, inf
    %v79 = vmin.f32 %v71, %v78
    %v80 = vmin.f32 %v73, %v75
    %v81 = vmin.f32 %v77, %v79
    %v82 = vmin.f32 %v80, %v81
    %83 = vmin.xlane.f32.xlu0 %v82
    %v84 = vpop.xlane.xlu0 %83
    %v85 = vsel %vm67, %v32, -inf
    %v86 = vsel %vm67, %v40, -inf
    %v87 = vsel %vm67, %v39, -inf
    %v88 = vsel %vm67, %v41, -inf
    %v89 = vsel %vm67, %v49, -inf
    %v90 = vmax.f32 %v85, %v89
    %v91 = vsel %vm67, %v57, -inf
    %v92 = vmax.f32 %v86, %v91
    %v93 = vsel %vm67, %v56, -inf
    %v94 = vmax.f32 %v87, %v93
    %v95 = vsel %vm67, %v58, -inf
    %v96 = vmax.f32 %v88, %v95
    %v97 = vmax.f32 %v90, %v92
    %v98 = vmax.f32 %v94, %v96
    %v99 = vmax.f32 %v97, %v98
    %100 = vmax.xlane.f32.xlu0 %v99
    %v101 = vpop.xlane.xlu0 %100
    %v102 = vsub.f32 %v101, %v84
    %v103 = vrcp.pop %v102
    %v104 = vmul.f32 %v103, 10.0
    %v105 = vmul.f32 %v84, %v104
    %v106 = vsub.f32 1.0, %v105
    %v109 = vunpack.c.l.s4 269488144
    %v110 = vunpack.c.0.s8 %v109
    %v111 = vlaneseq
    %v112 = vshrl.u32 %v111, 7
    %v113 = vsub.s32 %v110, %v112
    %v114 = vrot.slane %v104, %v113
    %v116 = vmul.f32 %v21, %v114
    %v117 = vmul.f32 %v22, %v114
    %v120 = vunpack.c.l.s4 269488144
    %v121 = vunpack.c.0.s8 %v120
    %v122 = vlaneseq
    %v123 = vshrl.u32 %v122, 7
    %v124 = vsub.s32 %v121, %v123
    %v125 = vrot.slane %v106, %v124
    %v127 = vadd.f32 %v116, %v125
    %v128 = vadd.f32 %v117, %v125
    %129 = vst [vmem:[#allocation5] sm:$0xff] %v127
    %130 = vst [vmem:[#allocation5 + $0x8] sm:$0xff] %v128
    // Predicated region
    $region10: #{tpu_custom_call.1} parent=1 // pred_check
      _
    $region11: #{tpu_custom_call.1} parent=1 // pred_check_branch
      %132 = sbr.rel (0) target = $region13
    $region12: #{tpu_custom_call.1} parent=1 // pred_region
      %s134 = ssub.s32 256, 256
      %135 = vsyncadd [#allocation4], %s134
      %s137 = sshll.u32 [#allocation5], 4
      %s138 = int_to_ptr.vmem [resolvable:$true] %s137
      %140 = dma.vmem_to_hbm [thread:$0]  %s138, 256, %s1, [#allocation4]
    $region13: #{tpu_custom_call.1} parent=1 // pred_fallthru
      _
    // Predicated region
    $region14: #{tpu_custom_call.1} parent=1 // pred_check
      _
    $region15: #{tpu_custom_call.1} parent=1 // pred_check_branch
      %142 = sbr.rel (0) target = $region17
    $region16: #{tpu_custom_call.1} parent=1 // pred_region
      %143 = dma.done [#allocation4], 256
    $region17: #{tpu_custom_call.1} parent=1 // pred_fallthru
      _
    %144 = vsyncpa [#allocation3], 1
    %145 = vsyncpa [#allocation4], 1

</llo_original>
